<compile_context>
chip_gen: v7x
topology: tpu7x:2x2x1
jax: 0.10.0
libtpu: 0.0.40
codegen_flags: <defaults>
</compile_context>

<pallas_src>
import functools

import jax
import jax.numpy as jnp
from jax.experimental import pallas as pl
from jax.experimental.pallas import tpu as pltpu

LANES = 128          # TPU lane width (last dim of every VMEM tile)
N_INPUTS = 7
N_HIDDEN = 64
N_OUTPUTS = 7


def _round_up(x, m):
    return (x + m - 1) // m * m


def policy_net_kernel(x_ref, p_ref, out_ref, *, k_pad, hid_pad, n_out):
    # x_ref  : (B, k_pad)  features in lanes [0, n_in), ones-column at lane n_in
    # p_ref  : (k_pad + hid_pad + 8, LANES) packed parameter slab:
    #            rows [0, k_pad)             : W1 (b1 folded in as row n_in)
    #            rows [k_pad, k_pad+hid_pad) : W2 (zero padded)
    #            row   k_pad + hid_pad       : b2
    # out_ref: (B, LANES)  softmax probs in lanes [0, n_out), zeros elsewhere
    x = x_ref[...]

    w1 = p_ref[0:k_pad, :]                                # (k_pad, LANES)
    w2 = p_ref[k_pad:k_pad + hid_pad, :]                  # (hid_pad, LANES)
    b2 = p_ref[k_pad + hid_pad:k_pad + hid_pad + 1, :]    # (1, LANES)

    # hidden = relu(x @ W1 + b1)   (b1 is the ones-column row of the W1 block)
    h = jnp.maximum(jnp.dot(x, w1, preferred_element_type=jnp.float32), 0.0)

    # logits = h @ W2 + b2   (padded hidden lanes hit zero rows of W2)
    logits = jnp.dot(h, w2, preferred_element_type=jnp.float32) + b2

    # softmax over the class axis; padded lanes -> -inf so exp() gives 0
    lane = jax.lax.broadcasted_iota(jnp.int32, logits.shape, 1)
    logits = jnp.where(lane < n_out, logits, -jnp.inf)
    m = jnp.max(logits, axis=1, keepdims=True)
    e = jnp.exp(logits - m)
    denom = jnp.sum(e, axis=1, keepdims=True)
    out_ref[...] = e * pl.reciprocal(denom, approx=False)


def pack_params(w1, b1, w2, b2):
    """Pack all parameters into one lane-dense (rows, 128) f32 slab."""
    n_in, n_hidden = w1.shape
    n_out = w2.shape[1]
    assert n_hidden <= LANES and n_out <= LANES and n_in + 1 <= LANES

    k_pad = _round_up(n_in + 1, 8)     # W1 rows / x lanes (incl. ones column)
    hid_pad = LANES                    # hidden lanes padded to full lane width
    rows = k_pad + hid_pad + 8         # b2 region padded to 8 sublanes

    slab = jnp.zeros((rows, LANES), jnp.float32)
    slab = slab.at[:n_in, :n_hidden].set(w1)
    slab = slab.at[n_in, :n_hidden].set(b1)                    # folded b1 row
    slab = slab.at[k_pad:k_pad + n_hidden, :n_out].set(w2)
    slab = slab.at[k_pad + hid_pad, :n_out].set(b2)
    return slab, k_pad, hid_pad, n_out


def make_policy_net_forward(w1, b1, w2, b2):
    """One-time host-side packing; returns a jitted forward(x) -> probs."""
    slab, k_pad, hid_pad, n_out = pack_params(w1, b1, w2, b2)
    n_in = w1.shape[0]

    kernel = functools.partial(
        policy_net_kernel, k_pad=k_pad, hid_pad=hid_pad, n_out=n_out)

    @jax.jit
    def forward(x):
        B = x.shape[0]
        # Pad x to k_pad lanes with a ones column (folds b1 into the matmul).
        x_aug = jnp.zeros((B, k_pad), jnp.float32)
        x_aug = x_aug.at[:, :n_in].set(x)
        x_aug = x_aug.at[:, n_in].set(1.0)

        out = pl.pallas_call(
            kernel,
            out_shape=jax.ShapeDtypeStruct((B, LANES), jnp.float32),
            in_specs=[
                pl.BlockSpec(memory_space=pltpu.MemorySpace.VMEM),
                pl.BlockSpec(memory_space=pltpu.MemorySpace.VMEM),
            ],
            out_specs=pl.BlockSpec(memory_space=pltpu.MemorySpace.VMEM),
        )(x_aug, slab)
        return out[:, :n_out]

    return forward


def init_params(key, n_inputs, n_hidden, n_outputs):
    # torch.nn.Linear default init: U(-1/sqrt(fan_in), 1/sqrt(fan_in)).
    # Weights stored transposed vs torch ((in, out)); biases are 1-D.
    k1, k2, k3, k4 = jax.random.split(key, 4)
    bound1 = 1.0 / jnp.sqrt(jnp.float32(n_inputs))
    bound2 = 1.0 / jnp.sqrt(jnp.float32(n_hidden))
    w1 = jax.random.uniform(k1, (n_inputs, n_hidden), jnp.float32, -bound1, bound1)
    b1 = jax.random.uniform(k2, (n_hidden,), jnp.float32, -bound1, bound1)
    w2 = jax.random.uniform(k3, (n_hidden, n_outputs), jnp.float32, -bound2, bound2)
    b2 = jax.random.uniform(k4, (n_outputs,), jnp.float32, -bound2, bound2)
    return w1, b1, w2, b2


# TODO(synk): the Adam optimizer and .loss() of PolicyNet are training-side and
# are not part of the forward pass implemented here.

if __name__ == "__main__":
    batch = 8
    key = jax.random.PRNGKey(0)
    k_x, k_p = jax.random.split(key)
    x = jax.random.normal(k_x, (batch, N_INPUTS), jnp.float32)
    w1, b1, w2, b2 = init_params(k_p, N_INPUTS, N_HIDDEN, N_OUTPUTS)

    forward = make_policy_net_forward(w1, b1, w2, b2)
    probs = jax.block_until_ready(forward(x))

    # Pure-JAX reference.
    h_ref = jnp.maximum(x @ w1 + b1, 0.0)
    ref = jax.nn.softmax(h_ref @ w2 + b2, axis=1)
    assert probs.shape == (batch, N_OUTPUTS)
    assert jnp.allclose(probs, ref, atol=1e-5, rtol=1e-5)
    assert jnp.allclose(jnp.sum(probs, axis=1), 1.0, atol=1e-5)

    print("KERNEL_OK")
</pallas_src>

<mosaic_0001>
module attributes {stable_mosaic.version = 11 : i64} {
  func.func @policy_net_kernel(%arg0: memref<8x8xf32, #tpu.memory_space<vmem>>, %arg1: memref<144x128xf32, #tpu.memory_space<vmem>>, %arg2: memref<8x128xf32, #tpu.memory_space<vmem>>) attributes {dimension_semantics = [], scalar_prefetch = 0 : i64, scratch_operands = 0 : i64, tpu.core_type = #tpu.core_type<tc>} {
    %c0 = arith.constant 0 : index
    %c0_0 = arith.constant 0 : index
    %0 = vector.load %arg0[%c0, %c0_0] : memref<8x8xf32, #tpu.memory_space<vmem>>, vector<8x8xf32>
    %c0_1 = arith.constant 0 : index
    %c0_2 = arith.constant 0 : index
    %1 = vector.load %arg1[%c0_1, %c0_2] : memref<144x128xf32, #tpu.memory_space<vmem>>, vector<8x128xf32>
    %c8 = arith.constant 8 : index
    %c0_3 = arith.constant 0 : index
    %2 = vector.load %arg1[%c8, %c0_3] : memref<144x128xf32, #tpu.memory_space<vmem>>, vector<128x128xf32>
    %c136 = arith.constant 136 : index
    %c0_4 = arith.constant 0 : index
    %3 = vector.load %arg1[%c136, %c0_4] : memref<144x128xf32, #tpu.memory_space<vmem>>, vector<1x128xf32>
    %cst = arith.constant dense<0.000000e+00> : vector<8x128xf32>
    %4 = tpu.matmul %0, %1, %cst {dimension_numbers = #tpu.dot_dimension_numbers<[1], [0], [0], [1], [0, 0, 1, 1], [], []>} : vector<8x8xf32>, vector<8x128xf32>, vector<8x128xf32> -> vector<8x128xf32>
    %cst_5 = arith.constant 0.000000e+00 : f32
    %5 = vector.broadcast %cst_5 : f32 to vector<8x128xf32>
    %6 = arith.maximumf %4, %5 : vector<8x128xf32>
    %cst_6 = arith.constant dense<0.000000e+00> : vector<8x128xf32>
    %7 = tpu.matmul %6, %2, %cst_6 {dimension_numbers = #tpu.dot_dimension_numbers<[1], [0], [0], [1], [0, 0, 1, 1], [], []>} : vector<8x128xf32>, vector<128x128xf32>, vector<8x128xf32> -> vector<8x128xf32>
    %8 = vector.broadcast %3 : vector<1x128xf32> to vector<8x128xf32>
    %9 = arith.addf %7, %8 : vector<8x128xf32>
    %10 = tpu.iota {dimensions = array<i32: 1>} : vector<8x128xi32>
    %c7_i32 = arith.constant 7 : i32
    %11 = vector.broadcast %c7_i32 : i32 to vector<8x128xi32>
    %12 = arith.cmpi slt, %10, %11 : vector<8x128xi32>
    %cst_7 = arith.constant 0xFF800000 : f32
    %13 = vector.broadcast %cst_7 : f32 to vector<8x128xf32>
    %14 = arith.select %12, %9, %13 : vector<8x128xi1>, vector<8x128xf32>
    %cst_8 = arith.constant dense<0xFF800000> : vector<8xf32>
    %15 = vector.multi_reduction <maximumf>, %14, %cst_8 [1] : vector<8x128xf32> to vector<8xf32>
    %16 = vector.shape_cast %15 : vector<8xf32> to vector<8x1xf32>
    %17 = vector.broadcast %16 : vector<8x1xf32> to vector<8x128xf32>
    %18 = arith.subf %14, %17 : vector<8x128xf32>
    %19 = math.exp %18 : vector<8x128xf32>
    %cst_9 = arith.constant dense<0.000000e+00> : vector<8xf32>
    %20 = vector.multi_reduction <add>, %19, %cst_9 [1] : vector<8x128xf32> to vector<8xf32>
    %21 = vector.shape_cast %20 : vector<8xf32> to vector<8x1xf32>
    %22 = tpu.reciprocal %21 : vector<8x1xf32> -> vector<8x1xf32>
    %23 = vector.broadcast %22 : vector<8x1xf32> to vector<8x128xf32>
    %24 = arith.mulf %19, %23 : vector<8x128xf32>
    %c0_10 = arith.constant 0 : index
    %c0_11 = arith.constant 0 : index
    %25 = vector.load %arg2[%c0_10, %c0_11] : memref<8x128xf32, #tpu.memory_space<vmem>>, vector<8x128xf32>
    tpu.vector_store %arg2[%c0_10, %c0_11], %24 {strides = array<i32>} : memref<8x128xf32, #tpu.memory_space<vmem>>, vector<8x128xf32>,
    return
  }
}

</mosaic_0001>

<llo_original>
// kernel: forward.1
$region0: #{forward.1}
  #allocation0 [shape = 'u32[]', space=smem, size = 0x4, offset = 0x4, fixed_abs, tag = 'smem constant byte address 0x4 - core index']
  #allocation1 [shape = 'u32[144,128]{1,0:T(1,128)}', space=vmem, size = 0x12000, scoped, tag = 'internal scratch']
  %s0 = inlined_call_operand.vmem [shape: f32[8,8], index: 0, kind: input, shape index: {}]
  %s1 = inlined_call_operand.hbm [shape: f32[144,128], index: 1, kind: input, shape index: {}]
  %s2 = inlined_call_operand.hbm [shape: f32[8,128], index: 2, kind: output, shape index: {}]
  %s3 = sld [smem:[#allocation0]]
  $region22: #{forward.1} parent=0
    _
  %s5 = ssub.s32 1, %s3
  %s6 = scalar_select 0, %s5, %s3
  $region1: #{forward.1} parent=0
    #allocation2 [shape = 'u8[73728]{0}', space=vmem, size = 0x12000, scoped, tag = 'input window, operand 1, single buffered']
    #allocation3 [shape = 's32[1]{0}', space=sflag, size = 0x4, scoped, tag = 'scoped memory for forward.1']
    #allocation4 [shape = 's32[1]{0}', space=sflag, size = 0x4, scoped, tag = 'scoped memory for forward.1']
    #allocation5 [shape = 'u8[4096]{0}', space=vmem, size = 0x1000, scoped, tag = 'output window, operand 0, single buffered']
    %7 = vsyncpa [#allocation3], 0
    %8 = vsyncpa [#allocation4], 0
    // Predicated region
    $region2: #{forward.1} parent=1 // pred_check
      _
    $region3: #{forward.1} parent=1 // pred_check_branch
      %10 = sbr.rel (0) target = $region5
    $region4: #{forward.1} parent=1 // pred_region
      _
    $region5: #{forward.1} parent=1 // pred_fallthru
      _
    // Predicated region
    $region6: #{forward.1} parent=1 // pred_check
      _
    $region7: #{forward.1} parent=1 // pred_check_branch
      %12 = sbr.rel (0) target = $region9
    $region8: #{forward.1} parent=1 // pred_region
      %s14 = ssub.s32 2304, 2304
      %15 = vsyncadd [#allocation3], %s14
      %s16 = sshll.u32 [#allocation2], 4
      %s17 = int_to_ptr.vmem [resolvable:$true] %s16
      %22 = dma.hbm_to_vmem [thread:$0]  %s1, 2304, %s17, [#allocation3], 128, 128, 8
    $region9: #{forward.1} parent=1 // pred_fallthru
      _
    // Predicated region
    $region10: #{forward.1} parent=1 // pred_check
      _
    $region11: #{forward.1} parent=1 // pred_check_branch
      %24 = sbr.rel (0) target = $region13
    $region12: #{forward.1} parent=1 // pred_region
      %25 = dma.done [#allocation3], 2304
    $region13: #{forward.1} parent=1 // pred_fallthru
      _
    %v26 = vld [vmem:[%s0] sm:$0xff]
    %v27 = vld [vmem:[#allocation2] sm:$0xff]
    %v28 = vld [vmem:[#allocation2 + $0x8] sm:$0xff]
    %v29 = vld [vmem:[#allocation2 + $0x10] sm:$0xff]
    %v30 = vld [vmem:[#allocation2 + $0x18] sm:$0xff]
    %v31 = vld [vmem:[#allocation2 + $0x20] sm:$0xff]
    %v32 = vld [vmem:[#allocation2 + $0x28] sm:$0xff]
    %v33 = vld [vmem:[#allocation2 + $0x30] sm:$0xff]
    %v34 = vld [vmem:[#allocation2 + $0x38] sm:$0xff]
    %v35 = vld [vmem:[#allocation2 + $0x40] sm:$0xff]
    %v36 = vld [vmem:[#allocation2 + $0x48] sm:$0xff]
    %v37 = vld [vmem:[#allocation2 + $0x50] sm:$0xff]
    %v38 = vld [vmem:[#allocation2 + $0x58] sm:$0xff]
    %v39 = vld [vmem:[#allocation2 + $0x60] sm:$0xff]
    %v40 = vld [vmem:[#allocation2 + $0x68] sm:$0xff]
    %v41 = vld [vmem:[#allocation2 + $0x70] sm:$0xff]
    %v42 = vld [vmem:[#allocation2 + $0x78] sm:$0xff]
    %v43 = vld [vmem:[#allocation2 + $0x80] sm:$0xff]
    %v44 = vld [vmem:[#allocation2 + $0x88] sm:$0x1]
    %vm45 = vcmask 64512
    %v47 = vsel %vm45, %v26, 0
    %49 = vmatprep.subr.mxu0 0.0
    %50 = vmatpush1.msra.mxu0 %v27
    %51 = vmatprep.subr.mxu0 0.0
    %52 = vmatpush1.msra.mxu0 0.0
    %53 = vmatprep.subr.mxu0 0.0
    %54 = vmatpush1.msra.mxu0 0.0
    %55 = vmatprep.subr.mxu0 0.0
    %56 = vmatpush1.msra.mxu0 0.0
    %57 = vmatprep.subr.mxu0 0.0
    %58 = vmatpush1.msra.mxu0 0.0
    %59 = vmatprep.subr.mxu0 0.0
    %60 = vmatpush1.msra.mxu0 0.0
    %61 = vmatprep.subr.mxu0 0.0
    %62 = vmatpush1.msra.mxu0 0.0
    %63 = vmatprep.subr.mxu0 0.0
    %64 = vmatpush1.msra.mxu0 0.0
    %65 = vmatprep.subr.mxu0 0.0
    %66 = vmatpush1.msra.mxu0 0.0
    %67 = vmatprep.subr.mxu0 0.0
    %68 = vmatpush1.msra.mxu0 0.0
    %69 = vmatprep.subr.mxu0 0.0
    %70 = vmatpush1.msra.mxu0 0.0
    %71 = vmatprep.subr.mxu0 0.0
    %72 = vmatpush1.msra.mxu0 0.0
    %73 = vmatprep.subr.mxu0 0.0
    %74 = vmatpush1.msra.mxu0 0.0
    %75 = vmatprep.subr.mxu0 0.0
    %76 = vmatpush1.msra.mxu0 0.0
    %77 = vmatprep.subr.mxu0 0.0
    %78 = vmatpush1.msra.mxu0 0.0
    %79 = vmatprep.subr.mxu0 0.0
    %80 = vmatpush1.msra.mxu0 0.0
    %81 = vmatprep.subr.mxu0 0.0
    %82 = vmatpush1.msra.mxu0 0.0
    %83 = vmatprep.subr.mxu0 0.0
    %84 = vmatpush1.msra.mxu0 0.0
    %85 = vmatprep.subr.mxu0 0.0
    %86 = vmatpush1.msra.mxu0 0.0
    %87 = vmatprep.subr.mxu0 0.0
    %88 = vmatpush1.msra.mxu0 0.0
    %89 = vmatprep.subr.mxu0 0.0
    %90 = vmatpush1.msra.mxu0 0.0
    %91 = vmatprep.subr.mxu0 0.0
    %92 = vmatpush1.msra.mxu0 0.0
    %93 = vmatprep.subr.mxu0 0.0
    %94 = vmatpush1.msra.mxu0 0.0
    %95 = vmatprep.subr.mxu0 0.0
    %96 = vmatpush1.msra.mxu0 0.0
    %97 = vmatprep.subr.mxu0 0.0
    %98 = vmatpush1.msra.mxu0 0.0
    %99 = vmatprep.subr.mxu0 0.0
    %100 = vmatpush1.msra.mxu0 0.0
    %101 = vmatprep.subr.mxu0 0.0
    %102 = vmatpush1.msra.mxu0 0.0
    %103 = vmatprep.subr.mxu0 0.0
    %104 = vmatpush1.msra.mxu0 0.0
    %105 = vmatprep.subr.mxu0 0.0
    %106 = vmatpush1.msra.mxu0 0.0
    %107 = vmatprep.subr.mxu0 0.0
    %108 = vmatpush1.msra.mxu0 0.0
    %109 = vmatprep.subr.mxu0 0.0
    %110 = vmatpush1.msra.mxu0 0.0
    %111 = vmatprep.subr.mxu0 0.0
    %112 = vmatpush1.msra.mxu0 0.0
    %113 = vmatprep.mubr.f32.mxu0 0.0
    %114 = vmatmul.mubr.f32.gmra.mrb[0].mxu0 %v47
    %v115 = vpop.f32.mrb[0].mxu0
    %v116 = vadd.f32 0.0, %v115
    %v117 = vpop.f32.mrb[0].mxu0
    %118 = vdwg.mxu0
    %v119 = vmax.f32 %v116, 0.0
    %v120 = vlaneseq
    %v121 = vshrl.u32 %v120, 7
    %v122 = vsub.s32 0, %v121
    %v123 = vrot.slane %v44, %v122
    %124 = vmatprep.subr.mxu0 0.0
    %125 = vmatpush1.msra.mxu0 %v28
    %126 = vmatprep.subr.mxu0 0.0
    %127 = vmatpush1.msra.mxu0 %v29
    %128 = vmatprep.subr.mxu0 0.0
    %129 = vmatpush1.msra.mxu0 %v30
    %130 = vmatprep.subr.mxu0 0.0
    %131 = vmatpush1.msra.mxu0 %v31
    %132 = vmatprep.subr.mxu0 0.0
    %133 = vmatpush1.msra.mxu0 %v32
    %134 = vmatprep.subr.mxu0 0.0
    %135 = vmatpush1.msra.mxu0 %v33
    %136 = vmatprep.subr.mxu0 0.0
    %137 = vmatpush1.msra.mxu0 %v34
    %138 = vmatprep.subr.mxu0 0.0
    %139 = vmatpush1.msra.mxu0 %v35
    %140 = vmatprep.subr.mxu0 0.0
    %141 = vmatpush1.msra.mxu0 %v36
    %142 = vmatprep.subr.mxu0 0.0
    %143 = vmatpush1.msra.mxu0 %v37
    %144 = vmatprep.subr.mxu0 0.0
    %145 = vmatpush1.msra.mxu0 %v38
    %146 = vmatprep.subr.mxu0 0.0
    %147 = vmatpush1.msra.mxu0 %v39
    %148 = vmatprep.subr.mxu0 0.0
    %149 = vmatpush1.msra.mxu0 %v40
    %150 = vmatprep.subr.mxu0 0.0
    %151 = vmatpush1.msra.mxu0 %v41
    %152 = vmatprep.subr.mxu0 0.0
    %153 = vmatpush1.msra.mxu0 %v42
    %154 = vmatprep.subr.mxu0 0.0
    %155 = vmatpush1.msra.mxu0 %v43
    %156 = vmatprep.subr.mxu0 0.0
    %157 = vmatpush1.msra.mxu0 0.0
    %158 = vmatprep.subr.mxu0 0.0
    %159 = vmatpush1.msra.mxu0 0.0
    %160 = vmatprep.subr.mxu0 0.0
    %161 = vmatpush1.msra.mxu0 0.0
    %162 = vmatprep.subr.mxu0 0.0
    %163 = vmatpush1.msra.mxu0 0.0
    %164 = vmatprep.subr.mxu0 0.0
    %165 = vmatpush1.msra.mxu0 0.0
    %166 = vmatprep.subr.mxu0 0.0
    %167 = vmatpush1.msra.mxu0 0.0
    %168 = vmatprep.subr.mxu0 0.0
    %169 = vmatpush1.msra.mxu0 0.0
    %170 = vmatprep.subr.mxu0 0.0
    %171 = vmatpush1.msra.mxu0 0.0
    %172 = vmatprep.subr.mxu0 0.0
    %173 = vmatpush1.msra.mxu0 0.0
    %174 = vmatprep.subr.mxu0 0.0
    %175 = vmatpush1.msra.mxu0 0.0
    %176 = vmatprep.subr.mxu0 0.0
    %177 = vmatpush1.msra.mxu0 0.0
    %178 = vmatprep.subr.mxu0 0.0
    %179 = vmatpush1.msra.mxu0 0.0
    %180 = vmatprep.subr.mxu0 0.0
    %181 = vmatpush1.msra.mxu0 0.0
    %182 = vmatprep.subr.mxu0 0.0
    %183 = vmatpush1.msra.mxu0 0.0
    %184 = vmatprep.subr.mxu0 0.0
    %185 = vmatpush1.msra.mxu0 0.0
    %186 = vmatprep.subr.mxu0 0.0
    %187 = vmatpush1.msra.mxu0 0.0
    %188 = vmatprep.mubr.f32.mxu0 0.0
    %189 = vmatmul.mubr.f32.gmra.mrb[0].mxu0 %v119
    %v190 = vpop.f32.mrb[0].mxu0
    %v191 = vadd.f32 %v123, %v190
    %v192 = vpop.f32.mrb[0].mxu0
    %193 = vdwg.mxu0
    %v194 = vlaneseq
    %v195 = vand.u32 %v194, 127
    %vm196 = vcmp.lt.s32.totalorder %v195, 7
    %v197 = vsel %vm196, %v191, -inf
    %198 = vmax.xlane.f32.xlu0 %v197
    %v199 = vpop.xlane.xlu0 %198
    %v200 = vsub.f32 %v197, %v199
    %v201 = vmul.f32 %v200, 1.442695
    %v202 = vpow.pop %v201
    %203 = vadd.xlane.f32.xlu0 %v202
    %v204 = vpop.xlane.xlu0 %203
    %v205 = vrcp.pop %v204
    %v206 = vmul.f32 %v202, %v205
    %207 = vst [vmem:[#allocation5] sm:$0xff] %v206
    // Predicated region
    $region14: #{forward.1} parent=1 // pred_check
      _
    $region15: #{forward.1} parent=1 // pred_check_branch
      %209 = sbr.rel (0) target = $region17
    $region16: #{forward.1} parent=1 // pred_region
      %s211 = ssub.s32 128, 128
      %212 = vsyncadd [#allocation4], %s211
      %s214 = sshll.u32 [#allocation5], 4
      %s215 = int_to_ptr.vmem [resolvable:$true] %s214
      %217 = dma.vmem_to_hbm [thread:$0]  %s215, 128, %s2, [#allocation4]
    $region17: #{forward.1} parent=1 // pred_fallthru
      _
    // Predicated region
    $region18: #{forward.1} parent=1 // pred_check
      _
    $region19: #{forward.1} parent=1 // pred_check_branch
      %219 = sbr.rel (0) target = $region21
    $region20: #{forward.1} parent=1 // pred_region
      %220 = dma.done [#allocation4], 128
    $region21: #{forward.1} parent=1 // pred_fallthru
      _
    %221 = vsyncpa [#allocation3], 1
    %222 = vsyncpa [#allocation4], 1

</llo_original>
